<compile_context>
chip_gen: v7x
topology: tpu7x:2x2x1
jax: 0.10.0
libtpu: 0.0.40
codegen_flags: <defaults>
</compile_context>

<pallas_src>
import functools
import math

import jax
import jax.numpy as jnp
from jax.experimental import pallas as pl
from jax.experimental.pallas import tpu as pltpu


def _round_up(x, m):
    return (x + m - 1) // m * m


def _ceil_div(a, b):
    return -(-a // b)


def _longrope_kernel(pos_ref, inv_ref, cos_ref, sin_ref, *, G, dim, scaling_factor):
    # pos_ref: (TR, G)      f32 — G flattened positions packed per output row
    # inv_ref: (1, G*dim)   f32 — [inv_half | inv_half] tiled G times (resident)
    # cos_ref / sin_ref: (TR, G*dim) output blocks, G*dim % 128 == 0 (lane-dense)
    TR = cos_ref.shape[0]
    pos = pos_ref[...]                                    # (TR, G)
    # Lane-group broadcast of positions: pos_e[:, g*dim + j] = pos[:, g].
    # Pure VPU/XLU work — those slots are slack in this HBM-store-bound kernel.
    pos_e = jnp.concatenate(
        [jnp.broadcast_to(pos[:, g:g + 1], (TR, dim)) for g in range(G)],
        axis=-1)                                          # (TR, G*dim)
    # emb = cat([freqs, freqs], -1) is realized through the inv_freq layout, so
    # no post-hoc concat / lane shuffle of the cos/sin results is needed.
    freqs = pos_e * inv_ref[...]                          # (TR, G*dim), f32
    c = jnp.cos(freqs)
    s = jnp.sin(freqs)
    if scaling_factor != 1.0:                             # compile-time Python constant
        c = c * scaling_factor
        s = s * scaling_factor
    cos_ref[...] = c.astype(cos_ref.dtype)                # dense, unmasked stores
    sin_ref[...] = s.astype(sin_ref.dtype)


def phi3_longrope_scaled_rotary_embedding(
    x,
    position_ids,
    *,
    dim,
    base,
    max_position_embeddings,
    original_max_position_embeddings,
    short_factor,
    long_factor,
    target_block_bytes=2 * 1024 * 1024,
):
    """Returns (cos, sin) each of shape (B, S, dim), dtype == x.dtype."""
    assert dim % 2 == 0, "head dim must be even"
    B, S = position_ids.shape
    half = dim // 2
    out_dtype = x.dtype
    out_bytes = jnp.dtype(out_dtype).itemsize

    # ---- tiny O(dim/2) prologue in plain JAX (data-dependent factor select) ----
    seq_len = jnp.max(position_ids) + 1
    ext_factors = jnp.where(
        seq_len > original_max_position_embeddings,
        jnp.asarray(long_factor, dtype=jnp.float32),
        jnp.asarray(short_factor, dtype=jnp.float32),
    )  # (half,)
    inv_freq_shape = jnp.arange(0, dim, 2, dtype=jnp.int32).astype(jnp.float32) / dim
    inv_half = 1.0 / (ext_factors * jnp.power(jnp.float32(base), inv_freq_shape))  # (half,)

    scale = max_position_embeddings / original_max_position_embeddings
    if scale <= 1.0:
        scaling_factor = 1.0
    else:
        scaling_factor = math.sqrt(
            1 + math.log(scale) / math.log(original_max_position_embeddings)
        )

    # ---- lane-dense packing: G logical rows per output row, G*dim % 128 == 0 ----
    G = 128 // math.gcd(half, 128)           # also makes G*half a multiple of 128
    W = G * dim
    inv_tiled = jnp.tile(jnp.concatenate([inv_half, inv_half]), G).reshape(1, W)

    N = B * S
    R = _ceil_div(N, G)                      # packed rows actually needed
    # ~2 MiB of output per table per grid step, but keep >= ~8 steps when the
    # table is big enough (v7x megacore sharding + pipelined writeback), and
    # never exceed the (sublane-padded) table itself.
    tr = max(16, (target_block_bytes // (W * out_bytes)) // 16 * 16)
    tr = min(tr, max(16, _round_up(_ceil_div(R, 8), 16)))
    tr = min(tr, _round_up(R, 16))
    R_pad = _round_up(R, tr)
    # Double-buffered VMEM ≈ 2*(tr*512 [lane-padded pos] + 2*tr*W*out_bytes) ≈ 10 MiB
    # at the defaults — fits v7x's 32 MiB scoped / 64 MiB physical VMEM.

    # Positions: f32 is exact up to 2^24 (~16.7M) — fine for LongRoPE contexts.
    pos = position_ids.reshape(N).astype(jnp.float32)
    if R_pad * G != N:
        pos = jnp.pad(pos, (0, R_pad * G - N))
    pos = pos.reshape(R_pad, G)

    kernel = functools.partial(
        _longrope_kernel, G=G, dim=dim, scaling_factor=scaling_factor
    )

    E = int(R_pad) * int(W)                  # padded elements per output table
    cos_p, sin_p = pl.pallas_call(
        kernel,
        out_shape=(
            jax.ShapeDtypeStruct((R_pad, W), out_dtype),
            jax.ShapeDtypeStruct((R_pad, W), out_dtype),
        ),
        grid=(R_pad // tr,),
        in_specs=[
            pl.BlockSpec((tr, G), lambda i: (i, 0)),   # packed positions, row-tiled
            pl.BlockSpec((1, W), lambda i: (0, 0)),    # inv_freq layout, resident
        ],
        out_specs=(
            pl.BlockSpec((tr, W), lambda i: (i, 0)),
            pl.BlockSpec((tr, W), lambda i: (i, 0)),
        ),
        compiler_params=pltpu.CompilerParams(
            dimension_semantics=("parallel",),
        ),
        cost_estimate=pl.CostEstimate(
            flops=3 * E,                     # mul + scale, both tables share freqs
            transcendentals=2 * E,           # cos + sin
            bytes_accessed=2 * E * out_bytes + 4 * int(R_pad) * int(G) + 4 * int(W),
        ),
    )(pos, inv_tiled)

    # Free row-major view back to flat rows; slice off padding only if present.
    cos = cos_p.reshape(R_pad * G, dim)
    sin = sin_p.reshape(R_pad * G, dim)
    if R_pad * G != N:
        cos = cos[:N]
        sin = sin[:N]
    return cos.reshape(B, S, dim), sin.reshape(B, S, dim)


def _reference(x, position_ids, *, dim, base, max_position_embeddings,
               original_max_position_embeddings, short_factor, long_factor):
    seq_len = jnp.max(position_ids) + 1
    ext_factors = jnp.where(
        seq_len > original_max_position_embeddings,
        jnp.asarray(long_factor, dtype=jnp.float32),
        jnp.asarray(short_factor, dtype=jnp.float32),
    )
    inv_freq_shape = jnp.arange(0, dim, 2, dtype=jnp.int32).astype(jnp.float32) / dim
    inv_freq = 1.0 / (ext_factors * jnp.power(jnp.float32(base), inv_freq_shape))
    freqs = position_ids.astype(jnp.float32)[:, :, None] * inv_freq[None, None, :]
    emb = jnp.concatenate([freqs, freqs], axis=-1)
    scale = max_position_embeddings / original_max_position_embeddings
    if scale <= 1.0:
        sf = 1.0
    else:
        sf = math.sqrt(1 + math.log(scale) / math.log(original_max_position_embeddings))
    return (jnp.cos(emb) * sf).astype(x.dtype), (jnp.sin(emb) * sf).astype(x.dtype)


if __name__ == "__main__":
    key = jax.random.PRNGKey(0)

    # Small config consistent with the module: head dim 32, rope_theta 10000.
    dim = 32
    base = 10000.0
    max_position_embeddings = 4096
    original_max_position_embeddings = 2048
    half = dim // 2

    # Deterministic synthetic rope_scaling factors (length dim//2 each).
    short_factor = 1.0 + 0.01 * jnp.arange(half, dtype=jnp.float32)
    long_factor = 1.5 + 0.02 * jnp.arange(half, dtype=jnp.float32)

    # Inputs: batch=2, seq=8. x is only used for dtype (as in the PyTorch module).
    B, S, H = 2, 8, 32
    kx, _ = jax.random.split(key)
    x = jax.random.normal(kx, (B, S, H), dtype=jnp.float32)
    position_ids = jnp.broadcast_to(jnp.arange(S, dtype=jnp.int32)[None, :], (B, S))

    cos, sin = phi3_longrope_scaled_rotary_embedding(
        x, position_ids,
        dim=dim, base=base,
        max_position_embeddings=max_position_embeddings,
        original_max_position_embeddings=original_max_position_embeddings,
        short_factor=short_factor, long_factor=long_factor,
    )
    jax.block_until_ready((cos, sin))

    cos_ref, sin_ref = _reference(
        x, position_ids,
        dim=dim, base=base,
        max_position_embeddings=max_position_embeddings,
        original_max_position_embeddings=original_max_position_embeddings,
        short_factor=short_factor, long_factor=long_factor,
    )
    assert cos.shape == (B, S, dim) and sin.shape == (B, S, dim)
    assert cos.dtype == x.dtype and sin.dtype == x.dtype
    assert jnp.allclose(cos, cos_ref, atol=1e-5, rtol=1e-5)
    assert jnp.allclose(sin, sin_ref, atol=1e-5, rtol=1e-5)

    print("KERNEL_OK")
</pallas_src>

<mosaic_0001>
module attributes {stable_mosaic.version = 11 : i64} {
  func.func @_longrope_kernel(%arg0: i32, %arg1: memref<16x8xf32, #tpu.memory_space<vmem>>, %arg2: memref<1x256xf32, #tpu.memory_space<vmem>>, %arg3: memref<16x256xf32, #tpu.memory_space<vmem>>, %arg4: memref<16x256xf32, #tpu.memory_space<vmem>>) attributes {dimension_semantics = [#tpu.dimension_semantics<parallel>], iteration_bounds = array<i64: 1>, scalar_prefetch = 0 : i64, scratch_operands = 0 : i64, tpu.core_type = #tpu.core_type<tc>, window_params = [{transform_indices = @transform_0, window_bounds = array<i64: 16, 8>}, {pipeline_mode = #tpu.pipeline_mode<synchronous>, transform_indices = @transform_1, window_bounds = array<i64: 1, 256>}, {transform_indices = @transform_2, window_bounds = array<i64: 16, 256>}, {transform_indices = @transform_3, window_bounds = array<i64: 16, 256>}]} {
    %c0 = arith.constant 0 : index
    %c0_0 = arith.constant 0 : index
    %0 = vector.load %arg1[%c0, %c0_0] : memref<16x8xf32, #tpu.memory_space<vmem>>, vector<16x8xf32>
    %1 = vector.extract_strided_slice %0 {offsets = [0, 0], sizes = [16, 1], strides = [1, 1]} : vector<16x8xf32> to vector<16x1xf32>
    %2 = vector.shape_cast %1 : vector<16x1xf32> to vector<16x1xf32>
    %3 = vector.broadcast %2 : vector<16x1xf32> to vector<16x32xf32>
    %4 = vector.extract_strided_slice %0 {offsets = [0, 1], sizes = [16, 1], strides = [1, 1]} : vector<16x8xf32> to vector<16x1xf32>
    %5 = vector.shape_cast %4 : vector<16x1xf32> to vector<16x1xf32>
    %6 = vector.broadcast %5 : vector<16x1xf32> to vector<16x32xf32>
    %7 = vector.extract_strided_slice %0 {offsets = [0, 2], sizes = [16, 1], strides = [1, 1]} : vector<16x8xf32> to vector<16x1xf32>
    %8 = vector.shape_cast %7 : vector<16x1xf32> to vector<16x1xf32>
    %9 = vector.broadcast %8 : vector<16x1xf32> to vector<16x32xf32>
    %10 = vector.extract_strided_slice %0 {offsets = [0, 3], sizes = [16, 1], strides = [1, 1]} : vector<16x8xf32> to vector<16x1xf32>
    %11 = vector.shape_cast %10 : vector<16x1xf32> to vector<16x1xf32>
    %12 = vector.broadcast %11 : vector<16x1xf32> to vector<16x32xf32>
    %13 = vector.extract_strided_slice %0 {offsets = [0, 4], sizes = [16, 1], strides = [1, 1]} : vector<16x8xf32> to vector<16x1xf32>
    %14 = vector.shape_cast %13 : vector<16x1xf32> to vector<16x1xf32>
    %15 = vector.broadcast %14 : vector<16x1xf32> to vector<16x32xf32>
    %16 = vector.extract_strided_slice %0 {offsets = [0, 5], sizes = [16, 1], strides = [1, 1]} : vector<16x8xf32> to vector<16x1xf32>
    %17 = vector.shape_cast %16 : vector<16x1xf32> to vector<16x1xf32>
    %18 = vector.broadcast %17 : vector<16x1xf32> to vector<16x32xf32>
    %19 = vector.extract_strided_slice %0 {offsets = [0, 6], sizes = [16, 1], strides = [1, 1]} : vector<16x8xf32> to vector<16x1xf32>
    %20 = vector.shape_cast %19 : vector<16x1xf32> to vector<16x1xf32>
    %21 = vector.broadcast %20 : vector<16x1xf32> to vector<16x32xf32>
    %22 = vector.extract_strided_slice %0 {offsets = [0, 7], sizes = [16, 1], strides = [1, 1]} : vector<16x8xf32> to vector<16x1xf32>
    %23 = vector.shape_cast %22 : vector<16x1xf32> to vector<16x1xf32>
    %24 = vector.broadcast %23 : vector<16x1xf32> to vector<16x32xf32>
    %25 = tpu.concatenate %3, %6, %9, %12, %15, %18, %21, %24 in 1 : vector<16x32xf32>, vector<16x32xf32>, vector<16x32xf32>, vector<16x32xf32>, vector<16x32xf32>, vector<16x32xf32>, vector<16x32xf32>, vector<16x32xf32> -> vector<16x256xf32>
    %c0_1 = arith.constant 0 : index
    %c0_2 = arith.constant 0 : index
    %26 = vector.load %arg2[%c0_1, %c0_2] : memref<1x256xf32, #tpu.memory_space<vmem>>, vector<1x256xf32>
    %27 = vector.broadcast %26 : vector<1x256xf32> to vector<16x256xf32>
    %28 = arith.mulf %25, %27 : vector<16x256xf32>
    %29 = math.cos %28 : vector<16x256xf32>
    %30 = math.sin %28 : vector<16x256xf32>
    %cst = arith.constant 1.0444659 : f32
    %31 = vector.broadcast %cst : f32 to vector<16x256xf32>
    %32 = arith.mulf %29, %31 : vector<16x256xf32>
    %cst_3 = arith.constant 1.0444659 : f32
    %33 = vector.broadcast %cst_3 : f32 to vector<16x256xf32>
    %34 = arith.mulf %30, %33 : vector<16x256xf32>
    %c0_4 = arith.constant 0 : index
    %c0_5 = arith.constant 0 : index
    %35 = vector.load %arg3[%c0_4, %c0_5] : memref<16x256xf32, #tpu.memory_space<vmem>>, vector<16x256xf32>
    tpu.vector_store %arg3[%c0_4, %c0_5], %32 {strides = array<i32>} : memref<16x256xf32, #tpu.memory_space<vmem>>, vector<16x256xf32>,
    %c0_6 = arith.constant 0 : index
    %c0_7 = arith.constant 0 : index
    %36 = vector.load %arg4[%c0_6, %c0_7] : memref<16x256xf32, #tpu.memory_space<vmem>>, vector<16x256xf32>
    tpu.vector_store %arg4[%c0_6, %c0_7], %34 {strides = array<i32>} : memref<16x256xf32, #tpu.memory_space<vmem>>, vector<16x256xf32>,
    return
  }
  func.func @transform_0(%arg0: i32) -> (i32, i32) {
    %c0_i32 = arith.constant 0 : i32
    %c0_i32_0 = arith.constant 0 : i32
    return %arg0, %c0_i32 : i32, i32
  }
  func.func @transform_1(%arg0: i32) -> (i32, i32) {
    %c0_i32 = arith.constant 0 : i32
    %c0_i32_0 = arith.constant 0 : i32
    %c0_i32_1 = arith.constant 0 : i32
    return %c0_i32, %c0_i32_0 : i32, i32
  }
  func.func @transform_2(%arg0: i32) -> (i32, i32) {
    %c0_i32 = arith.constant 0 : i32
    %c0_i32_0 = arith.constant 0 : i32
    return %arg0, %c0_i32 : i32, i32
  }
  func.func @transform_3(%arg0: i32) -> (i32, i32) {
    %c0_i32 = arith.constant 0 : i32
    %c0_i32_0 = arith.constant 0 : i32
    return %arg0, %c0_i32 : i32, i32
  }
}

</mosaic_0001>

<llo_original>
// kernel: tpu_custom_call.1
$region0: #{tpu_custom_call.1}
  #allocation0 [shape = 'u32[]', space=smem, size = 0x4, offset = 0x4, fixed_abs, tag = 'smem constant byte address 0x4 - core index']
  #allocation1 [shape = 'u32[144,128]{1,0:T(1,128)}', space=vmem, size = 0x12000, scoped, tag = 'internal scratch']
  %s0 = inlined_call_operand.vmem [shape: f32[16,8], index: 0, kind: input, shape index: {}]
  %s1 = inlined_call_operand.vmem [shape: f32[1,256], index: 1, kind: input, shape index: {}]
  %s2 = inlined_call_operand.hbm [shape: f32[16,256], index: 2, kind: output, shape index: {0}]
  %s3 = inlined_call_operand.hbm [shape: f32[16,256], index: 3, kind: output, shape index: {1}]
  %4 = xla_tuple %s2, %s3
  %s5 = sld [smem:[#allocation0]]
  $region26: #{tpu_custom_call.1} parent=0
    _
  %s7 = ssub.s32 1, %s5
  %s8 = scalar_select 0, %s7, %s5
  $region1: #{tpu_custom_call.1} parent=0
    #allocation2 [shape = 'u8[16384]{0}', space=vmem, size = 0x4000, scoped, tag = 'output window, operand 0, single buffered']
    #allocation3 [shape = 's32[1]{0}', space=sflag, size = 0x4, scoped, tag = 'scoped memory for tpu_custom_call.1']
    #allocation4 [shape = 'u8[16384]{0}', space=vmem, size = 0x4000, scoped, tag = 'output window, operand 1, single buffered']
    #allocation5 [shape = 's32[1]{0}', space=sflag, size = 0x4, scoped, tag = 'scoped memory for tpu_custom_call.1']
    %9 = vsyncpa [#allocation3], 0
    %10 = vsyncpa [#allocation5], 0
    // Predicated region
    $region2: #{tpu_custom_call.1} parent=1 // pred_check
      _
    $region3: #{tpu_custom_call.1} parent=1 // pred_check_branch
      %12 = sbr.rel (0) target = $region5
    $region4: #{tpu_custom_call.1} parent=1 // pred_region
      _
    $region5: #{tpu_custom_call.1} parent=1 // pred_fallthru
      _
    // Predicated region
    $region6: #{tpu_custom_call.1} parent=1 // pred_check
      _
    $region7: #{tpu_custom_call.1} parent=1 // pred_check_branch
      %14 = sbr.rel (0) target = $region9
    $region8: #{tpu_custom_call.1} parent=1 // pred_region
      _
    $region9: #{tpu_custom_call.1} parent=1 // pred_fallthru
      _
    %v15 = vld [vmem:[%s0] sm:$0xff]
    %v16 = vld [vmem:[%s0 + $0x8] sm:$0xff]
    %18 = vset.pattern.permute.xlu0 0
    %19 = vperm.xlu0 %18, %v15
    %v20 = vpop.permute.xlu0 %19
    %23 = vset.pattern.permute.xlu0 0
    %24 = vperm.xlu0 %23, %v16
    %v25 = vpop.permute.xlu0 %24
    %27 = vset.pattern.permute.xlu0 1
    %28 = vperm.xlu0 %27, %v15
    %v29 = vpop.permute.xlu0 %28
    %31 = vset.pattern.permute.xlu0 1
    %32 = vperm.xlu0 %31, %v16
    %v33 = vpop.permute.xlu0 %32
    %35 = vset.pattern.permute.xlu0 2
    %36 = vperm.xlu0 %35, %v15
    %v37 = vpop.permute.xlu0 %36
    %39 = vset.pattern.permute.xlu0 2
    %40 = vperm.xlu0 %39, %v16
    %v41 = vpop.permute.xlu0 %40
    %43 = vset.pattern.permute.xlu0 3
    %44 = vperm.xlu0 %43, %v15
    %v45 = vpop.permute.xlu0 %44
    %47 = vset.pattern.permute.xlu0 3
    %48 = vperm.xlu0 %47, %v16
    %v49 = vpop.permute.xlu0 %48
    %51 = vset.pattern.permute.xlu0 4
    %52 = vperm.xlu0 %51, %v15
    %v53 = vpop.permute.xlu0 %52
    %55 = vset.pattern.permute.xlu0 4
    %56 = vperm.xlu0 %55, %v16
    %v57 = vpop.permute.xlu0 %56
    %59 = vset.pattern.permute.xlu0 5
    %60 = vperm.xlu0 %59, %v15
    %v61 = vpop.permute.xlu0 %60
    %63 = vset.pattern.permute.xlu0 5
    %64 = vperm.xlu0 %63, %v16
    %v65 = vpop.permute.xlu0 %64
    %67 = vset.pattern.permute.xlu0 6
    %68 = vperm.xlu0 %67, %v15
    %v69 = vpop.permute.xlu0 %68
    %71 = vset.pattern.permute.xlu0 6
    %72 = vperm.xlu0 %71, %v16
    %v73 = vpop.permute.xlu0 %72
    %75 = vset.pattern.permute.xlu0 7
    %76 = vperm.xlu0 %75, %v15
    %v77 = vpop.permute.xlu0 %76
    %79 = vset.pattern.permute.xlu0 7
    %80 = vperm.xlu0 %79, %v16
    %v81 = vpop.permute.xlu0 %80
    %vm83 = vcmask 261120
    %v84 = vsel %vm83, %v20, %v29
    %v85 = vsel %vm83, %v25, %v33
    %vm86 = vcmask 523264
    %v87 = vsel %vm86, %v84, %v37
    %v88 = vsel %vm86, %v85, %v41
    %vm89 = vcmask 785408
    %v90 = vsel %vm89, %v87, %v45
    %v91 = vsel %vm89, %v88, %v49
    %v92 = vsel %vm83, %v53, %v61
    %v93 = vsel %vm83, %v57, %v65
    %v94 = vsel %vm86, %v92, %v69
    %v95 = vsel %vm86, %v93, %v73
    %v96 = vsel %vm89, %v94, %v77
    %v97 = vsel %vm89, %v95, %v81
    %v98 = vld [vmem:[%s1] sm:$0x3]
    %v100 = vlaneseq
    %v101 = vshrl.u32 %v100, 7
    %v102 = vsub.s32 0, %v101
    %v103 = vrot.slane %v98, %v102
    %v104 = vlaneseq
    %v105 = vshrl.u32 %v104, 7
    %v106 = vsub.s32 1, %v105
    %v107 = vrot.slane %v98, %v106
    %v110 = vmul.f32 %v90, %v103
    %v111 = vmul.f32 %v96, %v107
    %v112 = vmul.f32 %v91, %v103
    %v113 = vmul.f32 %v97, %v107
    %v114 = vand.u32 2147483647, %v110
    %vm115 = vcmp.le.f32.partialorder %v114, 0.7853982
    %vm116 = vcmp.lt.s32.totalorder %v110, 0
    %v117 = vand.u32 %v110, 2139095040
    %v118 = vshrl.u32 %v117, 23
    %v119 = vsub.s32 %v118, 127
    %v120 = vand.u32 2147483647, %v110
    %v121 = vand.u32 %v120, 8388607
    %v122 = vor.u32 %v121, 8388608
    %v123 = vsub.s32 0, %v122
    %v124 = vadd.s32 %v119, 1
    %vm125 = vcmp.gt.s32.totalorder %v124, 0
    %v126 = vsel %vm125, %v124, 0
    %v127 = vshrl.u32 %v126, 5
    %v128 = vand.u32 %v126, 31
    %v129 = vsub.s32 32, %v128
    %v130 = vshrl.u32 683565275, %v129
    %v131 = vshll.u32 683565275, %v128
    %v132 = vshrl.u32 2475754826, %v129
    %v133 = vor.u32 %v131, %v132
    %v134 = vshll.u32 2475754826, %v128
    %v135 = vshrl.u32 2131351028, %v129
    %v136 = vor.u32 %v134, %v135
    %v137 = vshll.u32 2131351028, %v128
    %v138 = vshrl.u32 2102212464, %v129
    %v139 = vor.u32 %v137, %v138
    %v140 = vshll.u32 2102212464, %v128
    %v141 = vshrl.u32 920167782, %v129
    %v142 = vor.u32 %v140, %v141
    %v143 = vshll.u32 920167782, %v128
    %v144 = vshrl.u32 1326507024, %v129
    %v145 = vor.u32 %v143, %v144
    %vm146 = vcmp.lt.s32.totalorder %v127, 1
    %vm147 = vcmp.lt.s32.totalorder %v127, 2
    %vm148 = vcmp.lt.s32.totalorder %v127, 3
    %vm149 = vcmp.lt.s32.totalorder %v127, 4
    %v150 = vsel %vm146, %v130, %v133
    %v151 = vsel %vm149, %v139, 2102212464
    %v152 = vsel %vm148, %v136, %v151
    %v153 = vsel %vm147, %v150, %v152
    %v154 = vsel %vm146, %v133, %v136
    %v155 = vsel %vm149, %v142, 920167782
    %v156 = vsel %vm148, %v139, %v155
    %v157 = vsel %vm147, %v154, %v156
    %v158 = vsel %vm146, %v136, %v139
    %v159 = vsel %vm149, %v145, 1326507024
    %v160 = vsel %vm148, %v142, %v159
    %v161 = vsel %vm147, %v158, %v160
    %v162 = vshll.u32 %v122, 8
    %v163 = vmul.u32.u64.compose %v162, %v161
    %v164 = vextract.low.u32 %v163
    %v165 = vextract.high.u32 %v163
    %v166 = vmul.u32.u64.compose %v162, %v157
    %v167 = vextract.low.u32 %v166
    %v168 = vextract.high.u32 %v166
    %v169 = vmul.u32 %v162, %v153
    %v170 = vadd.s32 %v165, %v167
    %vm171 = vc.u32 %v165, %v167
    %v172 = vadd.s32 %v168, 1
    %v173 = vsel %vm171, %v172, %v168
    %v174 = vadd.s32 %v169, %v173
    %v175 = vadd.s32 %v174, 536870912
    %v176 = vshrl.u32 %v175, 30
    %v177 = vshll.u32 %v176, 30
    %v178 = vsub.s32 %v174, %v177
    %vm179 = vcmp.lt.s32.totalorder %v178, 0
    %v180 = vsub.s32 0, %v178
    %v181 = vsel %vm179, %v180, %v178
    %v182 = vclz %v181
    %v183 = vsub.s32 %v182, 2
    %vm184 = vcmp.gt.s32.totalorder 0, %v183
    %v185 = vsel %vm184, 0, %v183
    %v186 = vsub.s32 32, %v185
    %v187 = vshll.u32 %v178, %v185
    %v188 = vshrl.u32 %v170, %v186
    %v189 = vor.u32 %v187, %v188
    %v190 = vsub.s32 4294967266, %v185
    %v191 = vadd.s32 %v190, 127
    %v192 = vshll.u32 %v191, 23
    %v193 = vor.u32 4788187, %v192
    %v194 = vand.u32 2147483647, %v193
    %v196 = vcvt.s32.f32 %v189
    %v197 = vmul.f32 %v196, %v194
    %v198 = vxor.u32 %v197, 2147483648
    %v199 = vsel %vm116, %v198, %v197
    %v200 = vsub.s32 4, %v176
    %v201 = vsel %vm116, %v200, %v176
    %v202 = vsel %vm115, %v110, %v199
    %v203 = vsel %vm115, 0, %v201
    %v204 = vcosq.f32.pop %v202
    %v205 = vsinq.f32.pop %v202
    %vm206 = vweird.f32 %v110
    %v207 = vand.u32 %v203, 3
    %vm208 = vcmp.lt.s32.totalorder %v207, 2
    %vm209 = vcmp.eq.s32.totalorder %v207, 0
    %v210 = vxor.u32 %v205, 2147483648
    %v211 = vsel %vm209, %v204, %v210
    %vm212 = vcmp.eq.s32.totalorder %v207, 2
    %v213 = vxor.u32 %v204, 2147483648
    %v214 = vsel %vm212, %v213, %v205
    %v215 = vsel %vm208, %v211, %v214
    %v216 = vsel %vm206, nan, %v215
    %v217 = vand.u32 2147483647, %v111
    %vm218 = vcmp.le.f32.partialorder %v217, 0.7853982
    %vm219 = vcmp.lt.s32.totalorder %v111, 0
    %v220 = vand.u32 %v111, 2139095040
    %v221 = vshrl.u32 %v220, 23
    %v222 = vsub.s32 %v221, 127
    %v223 = vand.u32 2147483647, %v111
    %v224 = vand.u32 %v223, 8388607
    %v225 = vor.u32 %v224, 8388608
    %v226 = vsub.s32 0, %v225
    %v227 = vadd.s32 %v222, 1
    %vm228 = vcmp.gt.s32.totalorder %v227, 0
    %v229 = vsel %vm228, %v227, 0
    %v230 = vshrl.u32 %v229, 5
    %v231 = vand.u32 %v229, 31
    %v232 = vsub.s32 32, %v231
    %v233 = vshrl.u32 683565275, %v232
    %v234 = vshll.u32 683565275, %v231
    %v235 = vshrl.u32 2475754826, %v232
    %v236 = vor.u32 %v234, %v235
    %v237 = vshll.u32 2475754826, %v231
    %v238 = vshrl.u32 2131351028, %v232
    %v239 = vor.u32 %v237, %v238
    %v240 = vshll.u32 2131351028, %v231
    %v241 = vshrl.u32 2102212464, %v232
    %v242 = vor.u32 %v240, %v241
    %v243 = vshll.u32 2102212464, %v231
    %v244 = vshrl.u32 920167782, %v232
    %v245 = vor.u32 %v243, %v244
    %v246 = vshll.u32 920167782, %v231
    %v247 = vshrl.u32 1326507024, %v232
    %v248 = vor.u32 %v246, %v247
    %vm249 = vcmp.lt.s32.totalorder %v230, 1
    %vm250 = vcmp.lt.s32.totalorder %v230, 2
    %vm251 = vcmp.lt.s32.totalorder %v230, 3
    %vm252 = vcmp.lt.s32.totalorder %v230, 4
    %v253 = vsel %vm249, %v233, %v236
    %v254 = vsel %vm252, %v242, 2102212464
    %v255 = vsel %vm251, %v239, %v254
    %v256 = vsel %vm250, %v253, %v255
    %v257 = vsel %vm249, %v236, %v239
    %v258 = vsel %vm252, %v245, 920167782
    %v259 = vsel %vm251, %v242, %v258
    %v260 = vsel %vm250, %v257, %v259
    %v261 = vsel %vm249, %v239, %v242
    %v262 = vsel %vm252, %v248, 1326507024
    %v263 = vsel %vm251, %v245, %v262
    %v264 = vsel %vm250, %v261, %v263
    %v265 = vshll.u32 %v225, 8
    %v266 = vmul.u32.u64.compose %v265, %v264
    %v267 = vextract.low.u32 %v266
    %v268 = vextract.high.u32 %v266
    %v269 = vmul.u32.u64.compose %v265, %v260
    %v270 = vextract.low.u32 %v269
    %v271 = vextract.high.u32 %v269
    %v272 = vmul.u32 %v265, %v256
    %v273 = vadd.s32 %v268, %v270
    %vm274 = vc.u32 %v268, %v270
    %v275 = vadd.s32 %v271, 1
    %v276 = vsel %vm274, %v275, %v271
    %v277 = vadd.s32 %v272, %v276
    %v278 = vadd.s32 %v277, 536870912
    %v279 = vshrl.u32 %v278, 30
    %v280 = vshll.u32 %v279, 30
    %v281 = vsub.s32 %v277, %v280
    %vm282 = vcmp.lt.s32.totalorder %v281, 0
    %v283 = vsub.s32 0, %v281
    %v284 = vsel %vm282, %v283, %v281
    %v285 = vclz %v284
    %v286 = vsub.s32 %v285, 2
    %vm287 = vcmp.gt.s32.totalorder 0, %v286
    %v288 = vsel %vm287, 0, %v286
    %v289 = vsub.s32 32, %v288
    %v290 = vshll.u32 %v281, %v288
    %v291 = vshrl.u32 %v273, %v289
    %v292 = vor.u32 %v290, %v291
    %v293 = vsub.s32 4294967266, %v288
    %v294 = vadd.s32 %v293, 127
    %v295 = vshll.u32 %v294, 23
    %v296 = vor.u32 4788187, %v295
    %v297 = vand.u32 2147483647, %v296
    %v299 = vcvt.s32.f32 %v292
    %v300 = vmul.f32 %v299, %v297
    %v301 = vxor.u32 %v300, 2147483648
    %v302 = vsel %vm219, %v301, %v300
    %v303 = vsub.s32 4, %v279
    %v304 = vsel %vm219, %v303, %v279
    %v305 = vsel %vm218, %v111, %v302
    %v306 = vsel %vm218, 0, %v304
    %v307 = vcosq.f32.pop %v305
    %v308 = vsinq.f32.pop %v305
    %vm309 = vweird.f32 %v111
    %v310 = vand.u32 %v306, 3
    %vm311 = vcmp.lt.s32.totalorder %v310, 2
    %vm312 = vcmp.eq.s32.totalorder %v310, 0
    %v313 = vxor.u32 %v308, 2147483648
    %v314 = vsel %vm312, %v307, %v313
    %vm315 = vcmp.eq.s32.totalorder %v310, 2
    %v316 = vxor.u32 %v307, 2147483648
    %v317 = vsel %vm315, %v316, %v308
    %v318 = vsel %vm311, %v314, %v317
    %v319 = vsel %vm309, nan, %v318
    %v320 = vand.u32 2147483647, %v112
    %vm321 = vcmp.le.f32.partialorder %v320, 0.7853982
    %vm322 = vcmp.lt.s32.totalorder %v112, 0
    %v323 = vand.u32 %v112, 2139095040
    %v324 = vshrl.u32 %v323, 23
    %v325 = vsub.s32 %v324, 127
    %v326 = vand.u32 2147483647, %v112
    %v327 = vand.u32 %v326, 8388607
    %v328 = vor.u32 %v327, 8388608
    %v329 = vsub.s32 0, %v328
    %v330 = vadd.s32 %v325, 1
    %vm331 = vcmp.gt.s32.totalorder %v330, 0
    %v332 = vsel %vm331, %v330, 0
    %v333 = vshrl.u32 %v332, 5
    %v334 = vand.u32 %v332, 31
    %v335 = vsub.s32 32, %v334
    %v336 = vshrl.u32 683565275, %v335
    %v337 = vshll.u32 683565275, %v334
    %v338 = vshrl.u32 2475754826, %v335
    %v339 = vor.u32 %v337, %v338
    %v340 = vshll.u32 2475754826, %v334
    %v341 = vshrl.u32 2131351028, %v335
    %v342 = vor.u32 %v340, %v341
    %v343 = vshll.u32 2131351028, %v334
    %v344 = vshrl.u32 2102212464, %v335
    %v345 = vor.u32 %v343, %v344
    %v346 = vshll.u32 2102212464, %v334
    %v347 = vshrl.u32 920167782, %v335
    %v348 = vor.u32 %v346, %v347
    %v349 = vshll.u32 920167782, %v334
    %v350 = vshrl.u32 1326507024, %v335
    %v351 = vor.u32 %v349, %v350
    %vm352 = vcmp.lt.s32.totalorder %v333, 1
    %vm353 = vcmp.lt.s32.totalorder %v333, 2
    %vm354 = vcmp.lt.s32.totalorder %v333, 3
    %vm355 = vcmp.lt.s32.totalorder %v333, 4
    %v356 = vsel %vm352, %v336, %v339
    %v357 = vsel %vm355, %v345, 2102212464
    %v358 = vsel %vm354, %v342, %v357
    %v359 = vsel %vm353, %v356, %v358
    %v360 = vsel %vm352, %v339, %v342
    %v361 = vsel %vm355, %v348, 920167782
    %v362 = vsel %vm354, %v345, %v361
    %v363 = vsel %vm353, %v360, %v362
    %v364 = vsel %vm352, %v342, %v345
    %v365 = vsel %vm355, %v351, 1326507024
    %v366 = vsel %vm354, %v348, %v365
    %v367 = vsel %vm353, %v364, %v366
    %v368 = vshll.u32 %v328, 8
    %v369 = vmul.u32.u64.compose %v368, %v367
    %v370 = vextract.low.u32 %v369
    %v371 = vextract.high.u32 %v369
    %v372 = vmul.u32.u64.compose %v368, %v363
    %v373 = vextract.low.u32 %v372
    %v374 = vextract.high.u32 %v372
    %v375 = vmul.u32 %v368, %v359
    %v376 = vadd.s32 %v371, %v373
    %vm377 = vc.u32 %v371, %v373
    %v378 = vadd.s32 %v374, 1
    %v379 = vsel %vm377, %v378, %v374
    %v380 = vadd.s32 %v375, %v379
    %v381 = vadd.s32 %v380, 536870912
    %v382 = vshrl.u32 %v381, 30
    %v383 = vshll.u32 %v382, 30
    %v384 = vsub.s32 %v380, %v383
    %vm385 = vcmp.lt.s32.totalorder %v384, 0
    %v386 = vsub.s32 0, %v384
    %v387 = vsel %vm385, %v386, %v384
    %v388 = vclz %v387
    %v389 = vsub.s32 %v388, 2
    %vm390 = vcmp.gt.s32.totalorder 0, %v389
    %v391 = vsel %vm390, 0, %v389
    %v392 = vsub.s32 32, %v391
    %v393 = vshll.u32 %v384, %v391
    %v394 = vshrl.u32 %v376, %v392
    %v395 = vor.u32 %v393, %v394
    %v396 = vsub.s32 4294967266, %v391
    %v397 = vadd.s32 %v396, 127
    %v398 = vshll.u32 %v397, 23
    %v399 = vor.u32 4788187, %v398
    %v400 = vand.u32 2147483647, %v399
    %v402 = vcvt.s32.f32 %v395
    %v403 = vmul.f32 %v402, %v400
    %v404 = vxor.u32 %v403, 2147483648
    %v405 = vsel %vm322, %v404, %v403
    %v406 = vsub.s32 4, %v382
    %v407 = vsel %vm322, %v406, %v382
    %v408 = vsel %vm321, %v112, %v405
    %v409 = vsel %vm321, 0, %v407
    %v410 = vcosq.f32.pop %v408
    %v411 = vsinq.f32.pop %v408
    %vm412 = vweird.f32 %v112
    %v413 = vand.u32 %v409, 3
    %vm414 = vcmp.lt.s32.totalorder %v413, 2
    %vm415 = vcmp.eq.s32.totalorder %v413, 0
    %v416 = vxor.u32 %v411, 2147483648
    %v417 = vsel %vm415, %v410, %v416
    %vm418 = vcmp.eq.s32.totalorder %v413, 2
    %v419 = vxor.u32 %v410, 2147483648
    %v420 = vsel %vm418, %v419, %v411
    %v421 = vsel %vm414, %v417, %v420
    %v422 = vsel %vm412, nan, %v421
    %v423 = vand.u32 2147483647, %v113
    %vm424 = vcmp.le.f32.partialorder %v423, 0.7853982
    %vm425 = vcmp.lt.s32.totalorder %v113, 0
    %v426 = vand.u32 %v113, 2139095040
    %v427 = vshrl.u32 %v426, 23
    %v428 = vsub.s32 %v427, 127
    %v429 = vand.u32 2147483647, %v113
    %v430 = vand.u32 %v429, 8388607
    %v431 = vor.u32 %v430, 8388608
    %v432 = vsub.s32 0, %v431
    %v433 = vadd.s32 %v428, 1
    %vm434 = vcmp.gt.s32.totalorder %v433, 0
    %v435 = vsel %vm434, %v433, 0
    %v436 = vshrl.u32 %v435, 5
    %v437 = vand.u32 %v435, 31
    %v438 = vsub.s32 32, %v437
    %v439 = vshrl.u32 683565275, %v438
    %v440 = vshll.u32 683565275, %v437
    %v441 = vshrl.u32 2475754826, %v438
    %v442 = vor.u32 %v440, %v441
    %v443 = vshll.u32 2475754826, %v437
    %v444 = vshrl.u32 2131351028, %v438
    %v445 = vor.u32 %v443, %v444
    %v446 = vshll.u32 2131351028, %v437
    %v447 = vshrl.u32 2102212464, %v438
    %v448 = vor.u32 %v446, %v447
    %v449 = vshll.u32 2102212464, %v437
    %v450 = vshrl.u32 920167782, %v438
    %v451 = vor.u32 %v449, %v450
    %v452 = vshll.u32 920167782, %v437
    %v453 = vshrl.u32 1326507024, %v438
    %v454 = vor.u32 %v452, %v453
    %vm455 = vcmp.lt.s32.totalorder %v436, 1
    %vm456 = vcmp.lt.s32.totalorder %v436, 2
    %vm457 = vcmp.lt.s32.totalorder %v436, 3
    %vm458 = vcmp.lt.s32.totalorder %v436, 4
    %v459 = vsel %vm455, %v439, %v442
    %v460 = vsel %vm458, %v448, 2102212464
    %v461 = vsel %vm457, %v445, %v460
    %v462 = vsel %vm456, %v459, %v461
    %v463 = vsel %vm455, %v442, %v445
    %v464 = vsel %vm458, %v451, 920167782
    %v465 = vsel %vm457, %v448, %v464
    %v466 = vsel %vm456, %v463, %v465
    %v467 = vsel %vm455, %v445, %v448
    %v468 = vsel %vm458, %v454, 1326507024
    %v469 = vsel %vm457, %v451, %v468
    %v470 = vsel %vm456, %v467, %v469
    %v471 = vshll.u32 %v431, 8
    %v472 = vmul.u32.u64.compose %v471, %v470
    %v473 = vextract.low.u32 %v472
    %v474 = vextract.high.u32 %v472
    %v475 = vmul.u32.u64.compose %v471, %v466
    %v476 = vextract.low.u32 %v475
    %v477 = vextract.high.u32 %v475
    %v478 = vmul.u32 %v471, %v462
    %v479 = vadd.s32 %v474, %v476
    %vm480 = vc.u32 %v474, %v476
    %v481 = vadd.s32 %v477, 1
    %v482 = vsel %vm480, %v481, %v477
    %v483 = vadd.s32 %v478, %v482
    %v484 = vadd.s32 %v483, 536870912
    %v485 = vshrl.u32 %v484, 30
    %v486 = vshll.u32 %v485, 30
    %v487 = vsub.s32 %v483, %v486
    %vm488 = vcmp.lt.s32.totalorder %v487, 0
    %v489 = vsub.s32 0, %v487
    %v490 = vsel %vm488, %v489, %v487
    %v491 = vclz %v490
    %v492 = vsub.s32 %v491, 2
    %vm493 = vcmp.gt.s32.totalorder 0, %v492
    %v494 = vsel %vm493, 0, %v492
    %v495 = vsub.s32 32, %v494
    %v496 = vshll.u32 %v487, %v494
    %v497 = vshrl.u32 %v479, %v495
    %v498 = vor.u32 %v496, %v497
    %v499 = vsub.s32 4294967266, %v494
    %v500 = vadd.s32 %v499, 127
    %v501 = vshll.u32 %v500, 23
    %v502 = vor.u32 4788187, %v501
    %v503 = vand.u32 2147483647, %v502
    %v505 = vcvt.s32.f32 %v498
    %v506 = vmul.f32 %v505, %v503
    %v507 = vxor.u32 %v506, 2147483648
    %v508 = vsel %vm425, %v507, %v506
    %v509 = vsub.s32 4, %v485
    %v510 = vsel %vm425, %v509, %v485
    %v511 = vsel %vm424, %v113, %v508
    %v512 = vsel %vm424, 0, %v510
    %v513 = vcosq.f32.pop %v511
    %v514 = vsinq.f32.pop %v511
    %vm515 = vweird.f32 %v113
    %v516 = vand.u32 %v512, 3
    %vm517 = vcmp.lt.s32.totalorder %v516, 2
    %vm518 = vcmp.eq.s32.totalorder %v516, 0
    %v519 = vxor.u32 %v514, 2147483648
    %v520 = vsel %vm518, %v513, %v519
    %vm521 = vcmp.eq.s32.totalorder %v516, 2
    %v522 = vxor.u32 %v513, 2147483648
    %v523 = vsel %vm521, %v522, %v514
    %v524 = vsel %vm517, %v520, %v523
    %v525 = vsel %vm515, nan, %v524
    %v526 = vand.u32 2147483647, %v110
    %vm527 = vcmp.le.f32.partialorder %v526, 0.7853982
    %vm528 = vcmp.lt.s32.totalorder %v110, 0
    %v529 = vand.u32 %v110, 2139095040
    %v530 = vshrl.u32 %v529, 23
    %v531 = vsub.s32 %v530, 127
    %v532 = vand.u32 2147483647, %v110
    %v533 = vand.u32 %v532, 8388607
    %v534 = vor.u32 %v533, 8388608
    %v535 = vsub.s32 0, %v534
    %v536 = vadd.s32 %v531, 1
    %vm537 = vcmp.gt.s32.totalorder %v536, 0
    %v538 = vsel %vm537, %v536, 0
    %v539 = vshrl.u32 %v538, 5
    %v540 = vand.u32 %v538, 31
    %v541 = vsub.s32 32, %v540
    %v542 = vshrl.u32 683565275, %v541
    %v543 = vshll.u32 683565275, %v540
    %v544 = vshrl.u32 2475754826, %v541
    %v545 = vor.u32 %v543, %v544
    %v546 = vshll.u32 2475754826, %v540
    %v547 = vshrl.u32 2131351028, %v541
    %v548 = vor.u32 %v546, %v547
    %v549 = vshll.u32 2131351028, %v540
    %v550 = vshrl.u32 2102212464, %v541
    %v551 = vor.u32 %v549, %v550
    %v552 = vshll.u32 2102212464, %v540
    %v553 = vshrl.u32 920167782, %v541
    %v554 = vor.u32 %v552, %v553
    %v555 = vshll.u32 920167782, %v540
    %v556 = vshrl.u32 1326507024, %v541
    %v557 = vor.u32 %v555, %v556
    %vm558 = vcmp.lt.s32.totalorder %v539, 1
    %vm559 = vcmp.lt.s32.totalorder %v539, 2
    %vm560 = vcmp.lt.s32.totalorder %v539, 3
    %vm561 = vcmp.lt.s32.totalorder %v539, 4
    %v562 = vsel %vm558, %v542, %v545
    %v563 = vsel %vm561, %v551, 2102212464
    %v564 = vsel %vm560, %v548, %v563
    %v565 = vsel %vm559, %v562, %v564
    %v566 = vsel %vm558, %v545, %v548
    %v567 = vsel %vm561, %v554, 920167782
    %v568 = vsel %vm560, %v551, %v567
    %v569 = vsel %vm559, %v566, %v568
    %v570 = vsel %vm558, %v548, %v551
    %v571 = vsel %vm561, %v557, 1326507024
    %v572 = vsel %vm560, %v554, %v571
    %v573 = vsel %vm559, %v570, %v572
    %v574 = vshll.u32 %v534, 8
    %v575 = vmul.u32.u64.compose %v574, %v573
    %v576 = vextract.low.u32 %v575
    %v577 = vextract.high.u32 %v575
    %v578 = vmul.u32.u64.compose %v574, %v569
    %v579 = vextract.low.u32 %v578
    %v580 = vextract.high.u32 %v578
    %v581 = vmul.u32 %v574, %v565
    %v582 = vadd.s32 %v577, %v579
    %vm583 = vc.u32 %v577, %v579
    %v584 = vadd.s32 %v580, 1
    %v585 = vsel %vm583, %v584, %v580
    %v586 = vadd.s32 %v581, %v585
    %v587 = vadd.s32 %v586, 536870912
    %v588 = vshrl.u32 %v587, 30
    %v589 = vshll.u32 %v588, 30
    %v590 = vsub.s32 %v586, %v589
    %vm591 = vcmp.lt.s32.totalorder %v590, 0
    %v592 = vsub.s32 0, %v590
    %v593 = vsel %vm591, %v592, %v590
    %v594 = vclz %v593
    %v595 = vsub.s32 %v594, 2
    %vm596 = vcmp.gt.s32.totalorder 0, %v595
    %v597 = vsel %vm596, 0, %v595
    %v598 = vsub.s32 32, %v597
    %v599 = vshll.u32 %v590, %v597
    %v600 = vshrl.u32 %v582, %v598
    %v601 = vor.u32 %v599, %v600
    %v602 = vsub.s32 4294967266, %v597
    %v603 = vadd.s32 %v602, 127
    %v604 = vshll.u32 %v603, 23
    %v605 = vor.u32 4788187, %v604
    %v606 = vand.u32 2147483647, %v605
    %v608 = vcvt.s32.f32 %v601
    %v609 = vmul.f32 %v608, %v606
    %v610 = vxor.u32 %v609, 2147483648
    %v611 = vsel %vm528, %v610, %v609
    %v612 = vsub.s32 4, %v588
    %v613 = vsel %vm528, %v612, %v588
    %v614 = vsel %vm527, %v110, %v611
    %v615 = vsel %vm527, 0, %v613
    %v616 = vcosq.f32.pop %v614
    %v617 = vsinq.f32.pop %v614
    %vm618 = vweird.f32 %v110
    %v619 = vadd.s32 %v615, 3
    %v620 = vand.u32 %v619, 3
    %vm621 = vcmp.lt.s32.totalorder %v620, 2
    %vm622 = vcmp.eq.s32.totalorder %v620, 0
    %v623 = vxor.u32 %v617, 2147483648
    %v624 = vsel %vm622, %v616, %v623
    %vm625 = vcmp.eq.s32.totalorder %v620, 2
    %v626 = vxor.u32 %v616, 2147483648
    %v627 = vsel %vm625, %v626, %v617
    %v628 = vsel %vm621, %v624, %v627
    %v629 = vsel %vm618, nan, %v628
    %v630 = vand.u32 2147483647, %v111
    %vm631 = vcmp.le.f32.partialorder %v630, 0.7853982
    %vm632 = vcmp.lt.s32.totalorder %v111, 0
    %v633 = vand.u32 %v111, 2139095040
    %v634 = vshrl.u32 %v633, 23
    %v635 = vsub.s32 %v634, 127
    %v636 = vand.u32 2147483647, %v111
    %v637 = vand.u32 %v636, 8388607
    %v638 = vor.u32 %v637, 8388608
    %v639 = vsub.s32 0, %v638
    %v640 = vadd.s32 %v635, 1
    %vm641 = vcmp.gt.s32.totalorder %v640, 0
    %v642 = vsel %vm641, %v640, 0
    %v643 = vshrl.u32 %v642, 5
    %v644 = vand.u32 %v642, 31
    %v645 = vsub.s32 32, %v644
    %v646 = vshrl.u32 683565275, %v645
    %v647 = vshll.u32 683565275, %v644
    %v648 = vshrl.u32 2475754826, %v645
    %v649 = vor.u32 %v647, %v648
    %v650 = vshll.u32 2475754826, %v644
    %v651 = vshrl.u32 2131351028, %v645
    %v652 = vor.u32 %v650, %v651
    %v653 = vshll.u32 2131351028, %v644
    %v654 = vshrl.u32 2102212464, %v645
    %v655 = vor.u32 %v653, %v654
    %v656 = vshll.u32 2102212464, %v644
    %v657 = vshrl.u32 920167782, %v645
    %v658 = vor.u32 %v656, %v657
    %v659 = vshll.u32 920167782, %v644
    %v660 = vshrl.u32 1326507024, %v645
    %v661 = vor.u32 %v659, %v660
    %vm662 = vcmp.lt.s32.totalorder %v643, 1
    %vm663 = vcmp.lt.s32.totalorder %v643, 2
    %vm664 = vcmp.lt.s32.totalorder %v643, 3
    %vm665 = vcmp.lt.s32.totalorder %v643, 4
    %v666 = vsel %vm662, %v646, %v649
    %v667 = vsel %vm665, %v655, 2102212464
    %v668 = vsel %vm664, %v652, %v667
    %v669 = vsel %vm663, %v666, %v668
    %v670 = vsel %vm662, %v649, %v652
    %v671 = vsel %vm665, %v658, 920167782
    %v672 = vsel %vm664, %v655, %v671
    %v673 = vsel %vm663, %v670, %v672
    %v674 = vsel %vm662, %v652, %v655
    %v675 = vsel %vm665, %v661, 1326507024
    %v676 = vsel %vm664, %v658, %v675
    %v677 = vsel %vm663, %v674, %v676
    %v678 = vshll.u32 %v638, 8
    %v679 = vmul.u32.u64.compose %v678, %v677
    %v680 = vextract.low.u32 %v679
    %v681 = vextract.high.u32 %v679
    %v682 = vmul.u32.u64.compose %v678, %v673
    %v683 = vextract.low.u32 %v682
    %v684 = vextract.high.u32 %v682
    %v685 = vmul.u32 %v678, %v669
    %v686 = vadd.s32 %v681, %v683
    %vm687 = vc.u32 %v681, %v683
    %v688 = vadd.s32 %v684, 1
    %v689 = vsel %vm687, %v688, %v684
    %v690 = vadd.s32 %v685, %v689
    %v691 = vadd.s32 %v690, 536870912
    %v692 = vshrl.u32 %v691, 30
    %v693 = vshll.u32 %v692, 30
    %v694 = vsub.s32 %v690, %v693
    %vm695 = vcmp.lt.s32.totalorder %v694, 0
    %v696 = vsub.s32 0, %v694
    %v697 = vsel %vm695, %v696, %v694
    %v698 = vclz %v697
    %v699 = vsub.s32 %v698, 2
    %vm700 = vcmp.gt.s32.totalorder 0, %v699
    %v701 = vsel %vm700, 0, %v699
    %v702 = vsub.s32 32, %v701
    %v703 = vshll.u32 %v694, %v701
    %v704 = vshrl.u32 %v686, %v702
    %v705 = vor.u32 %v703, %v704
    %v706 = vsub.s32 4294967266, %v701
    %v707 = vadd.s32 %v706, 127
    %v708 = vshll.u32 %v707, 23
    %v709 = vor.u32 4788187, %v708
    %v710 = vand.u32 2147483647, %v709
    %v712 = vcvt.s32.f32 %v705
    %v713 = vmul.f32 %v712, %v710
    %v714 = vxor.u32 %v713, 2147483648
    %v715 = vsel %vm632, %v714, %v713
    %v716 = vsub.s32 4, %v692
    %v717 = vsel %vm632, %v716, %v692
    %v718 = vsel %vm631, %v111, %v715
    %v719 = vsel %vm631, 0, %v717
    %v720 = vcosq.f32.pop %v718
    %v721 = vsinq.f32.pop %v718
    %vm722 = vweird.f32 %v111
    %v723 = vadd.s32 %v719, 3
    %v724 = vand.u32 %v723, 3
    %vm725 = vcmp.lt.s32.totalorder %v724, 2
    %vm726 = vcmp.eq.s32.totalorder %v724, 0
    %v727 = vxor.u32 %v721, 2147483648
    %v728 = vsel %vm726, %v720, %v727
    %vm729 = vcmp.eq.s32.totalorder %v724, 2
    %v730 = vxor.u32 %v720, 2147483648
    %v731 = vsel %vm729, %v730, %v721
    %v732 = vsel %vm725, %v728, %v731
    %v733 = vsel %vm722, nan, %v732
    %v734 = vand.u32 2147483647, %v112
    %vm735 = vcmp.le.f32.partialorder %v734, 0.7853982
    %vm736 = vcmp.lt.s32.totalorder %v112, 0
    %v737 = vand.u32 %v112, 2139095040
    %v738 = vshrl.u32 %v737, 23
    %v739 = vsub.s32 %v738, 127
    %v740 = vand.u32 2147483647, %v112
    %v741 = vand.u32 %v740, 8388607
    %v742 = vor.u32 %v741, 8388608
    %v743 = vsub.s32 0, %v742
    %v744 = vadd.s32 %v739, 1
    %vm745 = vcmp.gt.s32.totalorder %v744, 0
    %v746 = vsel %vm745, %v744, 0
    %v747 = vshrl.u32 %v746, 5
    %v748 = vand.u32 %v746, 31
    %v749 = vsub.s32 32, %v748
    %v750 = vshrl.u32 683565275, %v749
    %v751 = vshll.u32 683565275, %v748
    %v752 = vshrl.u32 2475754826, %v749
    %v753 = vor.u32 %v751, %v752
    %v754 = vshll.u32 2475754826, %v748
    %v755 = vshrl.u32 2131351028, %v749
    %v756 = vor.u32 %v754, %v755
    %v757 = vshll.u32 2131351028, %v748
    %v758 = vshrl.u32 2102212464, %v749
    %v759 = vor.u32 %v757, %v758
    %v760 = vshll.u32 2102212464, %v748
    %v761 = vshrl.u32 920167782, %v749
    %v762 = vor.u32 %v760, %v761
    %v763 = vshll.u32 920167782, %v748
    %v764 = vshrl.u32 1326507024, %v749
    %v765 = vor.u32 %v763, %v764
    %vm766 = vcmp.lt.s32.totalorder %v747, 1
    %vm767 = vcmp.lt.s32.totalorder %v747, 2
    %vm768 = vcmp.lt.s32.totalorder %v747, 3
    %vm769 = vcmp.lt.s32.totalorder %v747, 4
    %v770 = vsel %vm766, %v750, %v753
    %v771 = vsel %vm769, %v759, 2102212464
    %v772 = vsel %vm768, %v756, %v771
    %v773 = vsel %vm767, %v770, %v772
    %v774 = vsel %vm766, %v753, %v756
    %v775 = vsel %vm769, %v762, 920167782
    %v776 = vsel %vm768, %v759, %v775
    %v777 = vsel %vm767, %v774, %v776
    %v778 = vsel %vm766, %v756, %v759
    %v779 = vsel %vm769, %v765, 1326507024
    %v780 = vsel %vm768, %v762, %v779
    %v781 = vsel %vm767, %v778, %v780
    %v782 = vshll.u32 %v742, 8
    %v783 = vmul.u32.u64.compose %v782, %v781
    %v784 = vextract.low.u32 %v783
    %v785 = vextract.high.u32 %v783
    %v786 = vmul.u32.u64.compose %v782, %v777
    %v787 = vextract.low.u32 %v786
    %v788 = vextract.high.u32 %v786
    %v789 = vmul.u32 %v782, %v773
    %v790 = vadd.s32 %v785, %v787
    %vm791 = vc.u32 %v785, %v787
    %v792 = vadd.s32 %v788, 1
    %v793 = vsel %vm791, %v792, %v788
    %v794 = vadd.s32 %v789, %v793
    %v795 = vadd.s32 %v794, 536870912
    %v796 = vshrl.u32 %v795, 30
    %v797 = vshll.u32 %v796, 30
    %v798 = vsub.s32 %v794, %v797
    %vm799 = vcmp.lt.s32.totalorder %v798, 0
    %v800 = vsub.s32 0, %v798
    %v801 = vsel %vm799, %v800, %v798
    %v802 = vclz %v801
    %v803 = vsub.s32 %v802, 2
    %vm804 = vcmp.gt.s32.totalorder 0, %v803
    %v805 = vsel %vm804, 0, %v803
    %v806 = vsub.s32 32, %v805
    %v807 = vshll.u32 %v798, %v805
    %v808 = vshrl.u32 %v790, %v806
    %v809 = vor.u32 %v807, %v808
    %v810 = vsub.s32 4294967266, %v805
    %v811 = vadd.s32 %v810, 127
    %v812 = vshll.u32 %v811, 23
    %v813 = vor.u32 4788187, %v812
    %v814 = vand.u32 2147483647, %v813
    %v816 = vcvt.s32.f32 %v809
    %v817 = vmul.f32 %v816, %v814
    %v818 = vxor.u32 %v817, 2147483648
    %v819 = vsel %vm736, %v818, %v817
    %v820 = vsub.s32 4, %v796
    %v821 = vsel %vm736, %v820, %v796
    %v822 = vsel %vm735, %v112, %v819
    %v823 = vsel %vm735, 0, %v821
    %v824 = vcosq.f32.pop %v822
    %v825 = vsinq.f32.pop %v822
    %vm826 = vweird.f32 %v112
    %v827 = vadd.s32 %v823, 3
    %v828 = vand.u32 %v827, 3
    %vm829 = vcmp.lt.s32.totalorder %v828, 2
    %vm830 = vcmp.eq.s32.totalorder %v828, 0
    %v831 = vxor.u32 %v825, 2147483648
    %v832 = vsel %vm830, %v824, %v831
    %vm833 = vcmp.eq.s32.totalorder %v828, 2
    %v834 = vxor.u32 %v824, 2147483648
    %v835 = vsel %vm833, %v834, %v825
    %v836 = vsel %vm829, %v832, %v835
    %v837 = vsel %vm826, nan, %v836
    %v838 = vand.u32 2147483647, %v113
    %vm839 = vcmp.le.f32.partialorder %v838, 0.7853982
    %vm840 = vcmp.lt.s32.totalorder %v113, 0
    %v841 = vand.u32 %v113, 2139095040
    %v842 = vshrl.u32 %v841, 23
    %v843 = vsub.s32 %v842, 127
    %v844 = vand.u32 2147483647, %v113
    %v845 = vand.u32 %v844, 8388607
    %v846 = vor.u32 %v845, 8388608
    %v847 = vsub.s32 0, %v846
    %v848 = vadd.s32 %v843, 1
    %vm849 = vcmp.gt.s32.totalorder %v848, 0
    %v850 = vsel %vm849, %v848, 0
    %v851 = vshrl.u32 %v850, 5
    %v852 = vand.u32 %v850, 31
    %v853 = vsub.s32 32, %v852
    %v854 = vshrl.u32 683565275, %v853
    %v855 = vshll.u32 683565275, %v852
    %v856 = vshrl.u32 2475754826, %v853
    %v857 = vor.u32 %v855, %v856
    %v858 = vshll.u32 2475754826, %v852
    %v859 = vshrl.u32 2131351028, %v853
    %v860 = vor.u32 %v858, %v859
    %v861 = vshll.u32 2131351028, %v852
    %v862 = vshrl.u32 2102212464, %v853
    %v863 = vor.u32 %v861, %v862
    %v864 = vshll.u32 2102212464, %v852
    %v865 = vshrl.u32 920167782, %v853
    %v866 = vor.u32 %v864, %v865
    %v867 = vshll.u32 920167782, %v852
    %v868 = vshrl.u32 1326507024, %v853
    %v869 = vor.u32 %v867, %v868
    %vm870 = vcmp.lt.s32.totalorder %v851, 1
    %vm871 = vcmp.lt.s32.totalorder %v851, 2
    %vm872 = vcmp.lt.s32.totalorder %v851, 3
    %vm873 = vcmp.lt.s32.totalorder %v851, 4
    %v874 = vsel %vm870, %v854, %v857
    %v875 = vsel %vm873, %v863, 2102212464
    %v876 = vsel %vm872, %v860, %v875
    %v877 = vsel %vm871, %v874, %v876
    %v878 = vsel %vm870, %v857, %v860
    %v879 = vsel %vm873, %v866, 920167782
    %v880 = vsel %vm872, %v863, %v879
    %v881 = vsel %vm871, %v878, %v880
    %v882 = vsel %vm870, %v860, %v863
    %v883 = vsel %vm873, %v869, 1326507024
    %v884 = vsel %vm872, %v866, %v883
    %v885 = vsel %vm871, %v882, %v884
    %v886 = vshll.u32 %v846, 8
    %v887 = vmul.u32.u64.compose %v886, %v885
    %v888 = vextract.low.u32 %v887
    %v889 = vextract.high.u32 %v887
    %v890 = vmul.u32.u64.compose %v886, %v881
    %v891 = vextract.low.u32 %v890
    %v892 = vextract.high.u32 %v890
    %v893 = vmul.u32 %v886, %v877
    %v894 = vadd.s32 %v889, %v891
    %vm895 = vc.u32 %v889, %v891
    %v896 = vadd.s32 %v892, 1
    %v897 = vsel %vm895, %v896, %v892
    %v898 = vadd.s32 %v893, %v897
    %v899 = vadd.s32 %v898, 536870912
    %v900 = vshrl.u32 %v899, 30
    %v901 = vshll.u32 %v900, 30
    %v902 = vsub.s32 %v898, %v901
    %vm903 = vcmp.lt.s32.totalorder %v902, 0
    %v904 = vsub.s32 0, %v902
    %v905 = vsel %vm903, %v904, %v902
    %v906 = vclz %v905
    %v907 = vsub.s32 %v906, 2
    %vm908 = vcmp.gt.s32.totalorder 0, %v907
    %v909 = vsel %vm908, 0, %v907
    %v910 = vsub.s32 32, %v909
    %v911 = vshll.u32 %v902, %v909
    %v912 = vshrl.u32 %v894, %v910
    %v913 = vor.u32 %v911, %v912
    %v914 = vsub.s32 4294967266, %v909
    %v915 = vadd.s32 %v914, 127
    %v916 = vshll.u32 %v915, 23
    %v917 = vor.u32 4788187, %v916
    %v918 = vand.u32 2147483647, %v917
    %v920 = vcvt.s32.f32 %v913
    %v921 = vmul.f32 %v920, %v918
    %v922 = vxor.u32 %v921, 2147483648
    %v923 = vsel %vm840, %v922, %v921
    %v924 = vsub.s32 4, %v900
    %v925 = vsel %vm840, %v924, %v900
    %v926 = vsel %vm839, %v113, %v923
    %v927 = vsel %vm839, 0, %v925
    %v928 = vcosq.f32.pop %v926
    %v929 = vsinq.f32.pop %v926
    %vm930 = vweird.f32 %v113
    %v931 = vadd.s32 %v927, 3
    %v932 = vand.u32 %v931, 3
    %vm933 = vcmp.lt.s32.totalorder %v932, 2
    %vm934 = vcmp.eq.s32.totalorder %v932, 0
    %v935 = vxor.u32 %v929, 2147483648
    %v936 = vsel %vm934, %v928, %v935
    %vm937 = vcmp.eq.s32.totalorder %v932, 2
    %v938 = vxor.u32 %v928, 2147483648
    %v939 = vsel %vm937, %v938, %v929
    %v940 = vsel %vm933, %v936, %v939
    %v941 = vsel %vm930, nan, %v940
    %v942 = vmul.f32 %v216, 1.0444659
    %v943 = vmul.f32 %v319, 1.0444659
    %v944 = vmul.f32 %v422, 1.0444659
    %v945 = vmul.f32 %v525, 1.0444659
    %v946 = vmul.f32 %v629, 1.0444659
    %v947 = vmul.f32 %v733, 1.0444659
    %v948 = vmul.f32 %v837, 1.0444659
    %v949 = vmul.f32 %v941, 1.0444659
    %950 = vst [vmem:[#allocation2] sm:$0xff] %v942
    %951 = vst [vmem:[#allocation2 + $0x8] sm:$0xff] %v943
    %952 = vst [vmem:[#allocation2 + $0x10] sm:$0xff] %v944
    %953 = vst [vmem:[#allocation2 + $0x18] sm:$0xff] %v945
    %954 = vst [vmem:[#allocation4] sm:$0xff] %v946
    %955 = vst [vmem:[#allocation4 + $0x8] sm:$0xff] %v947
    %956 = vst [vmem:[#allocation4 + $0x10] sm:$0xff] %v948
    %957 = vst [vmem:[#allocation4 + $0x18] sm:$0xff] %v949
    // Predicated region
    $region10: #{tpu_custom_call.1} parent=1 // pred_check
      _
    $region11: #{tpu_custom_call.1} parent=1 // pred_check_branch
      %959 = sbr.rel (0) target = $region13
    $region12: #{tpu_custom_call.1} parent=1 // pred_region
      %s961 = ssub.s32 512, 512
      %962 = vsyncadd [#allocation3], %s961
      %s963 = sshll.u32 [#allocation2], 4
      %s964 = int_to_ptr.vmem [resolvable:$true] %s963
      %969 = dma.vmem_to_hbm [thread:$0]  %s964, 512, %s2, [#allocation3], 256, 256, 16
    $region13: #{tpu_custom_call.1} parent=1 // pred_fallthru
      _
    // Predicated region
    $region14: #{tpu_custom_call.1} parent=1 // pred_check
      _
    $region15: #{tpu_custom_call.1} parent=1 // pred_check_branch
      %971 = sbr.rel (0) target = $region17
    $region16: #{tpu_custom_call.1} parent=1 // pred_region
      %s973 = ssub.s32 512, 512
      %974 = vsyncadd [#allocation5], %s973
      %s975 = sshll.u32 [#allocation4], 4
      %s976 = int_to_ptr.vmem [resolvable:$true] %s975
      %981 = dma.vmem_to_hbm [thread:$0]  %s976, 512, %s3, [#allocation5], 256, 256, 16
    $region17: #{tpu_custom_call.1} parent=1 // pred_fallthru
      _
    // Predicated region
    $region18: #{tpu_custom_call.1} parent=1 // pred_check
      _
    $region19: #{tpu_custom_call.1} parent=1 // pred_check_branch
      %983 = sbr.rel (0) target = $region21
    $region20: #{tpu_custom_call.1} parent=1 // pred_region
      %984 = dma.done [#allocation3], 512
    $region21: #{tpu_custom_call.1} parent=1 // pred_fallthru
      _
    // Predicated region
    $region22: #{tpu_custom_call.1} parent=1 // pred_check
      _
    $region23: #{tpu_custom_call.1} parent=1 // pred_check_branch
      %986 = sbr.rel (0) target = $region25
    $region24: #{tpu_custom_call.1} parent=1 // pred_region
      %987 = dma.done [#allocation5], 512
    $region25: #{tpu_custom_call.1} parent=1 // pred_fallthru
      _
    %988 = vsyncpa [#allocation3], 1
    %989 = vsyncpa [#allocation5], 1

</llo_original>
